<compile_context>
chip_gen: v5e
topology: v5e:2x2
jax: 0.10.0
libtpu: 0.0.40
codegen_flags: <defaults>
</compile_context>

<pallas_src>
import functools

import jax
import jax.numpy as jnp
from jax.experimental import pallas as pl
from jax.experimental.pallas import tpu as pltpu


def _multiple_loss_kernel(tgt_ref, *refs, alpha, n_heads, batch, tile_b):
    """One batch tile: per-head softmax + CE, weighted partial loss out."""
    logit_refs = refs[:n_heads]
    out_ref = refs[n_heads]

    t = pl.program_id(0)
    ragged = (batch % tile_b) != 0            # compile-time Python bool
    if ragged:
        row = jax.lax.broadcasted_iota(jnp.int32, (tile_b, 1), 0)
        valid = (t * tile_b + row) < batch    # (tile_b, 1) bool

    tile_loss = jnp.float32(0.0)
    for h in range(n_heads):                  # static loop: no concat, no iota weights
        x = logit_refs[h][...].astype(jnp.float32)          # (tile_b, C_h)
        if ragged:
            x = jnp.where(valid, x, 0.0)                    # sanitize OOB pad rows

        # s = softmax(x, axis=-1)
        m = jnp.max(x, axis=-1, keepdims=True)
        e = jnp.exp(x - m)
        denom = jnp.sum(e, axis=-1, keepdims=True)          # (tile_b, 1)
        inv = pl.reciprocal(denom, approx=True)             # EUP slot (cheap)
        inv = inv * (2.0 - denom * inv)                     # one Newton step -> ~exact
        s = e * inv

        # CrossEntropy on the already-softmaxed values (keeps PyTorch's double
        # softmax).  s in (0, 1] so no max-subtraction is needed for the lse.
        lse = jnp.log(jnp.sum(jnp.exp(s), axis=-1, keepdims=True))      # (tile_b, 1)
        cls = jax.lax.broadcasted_iota(jnp.int32, s.shape, 1)
        tgt_h = tgt_ref[:, h:h + 1]                                     # (tile_b, 1)
        picked = jnp.sum(jnp.where(cls == tgt_h, s, 0.0),
                         axis=-1, keepdims=True)                        # (tile_b, 1)
        per_row = lse - picked
        if ragged:
            per_row = jnp.where(valid, per_row, 0.0)

        # Head 0 -> 1/B, heads 1..H-1 -> alpha/(H*B)  (the 1/B folds in the CE mean).
        w = (1.0 / batch) if h == 0 else (alpha / (n_heads * batch))
        tile_loss = tile_loss + jnp.float32(w) * jnp.sum(per_row)

    # Lane-dense, unmasked full-tile store of the partial loss; wrapper reads [0, 0].
    out_ref[...] = jnp.full((1, 8, 128), tile_loss, dtype=jnp.float32)


def multiple_loss(outputs, targets, alpha=1.0, tile_b=512):
    """outputs: list of H arrays (B, C_h) (any float dtype); targets: (B, H) int.
    Returns the scalar loss (float32)."""
    n_heads = len(outputs)
    B = outputs[0].shape[0]
    class_counts = [o.shape[1] for o in outputs]

    # Tile the batch: full batch if small (block == full dim is always legal),
    # otherwise a multiple-of-8 tile that lets BlockSpec double-buffer the DMA.
    tile_b = B if B <= tile_b else tile_b
    num_tiles = pl.cdiv(B, tile_b)

    tgt = targets.astype(jnp.int32)                         # (B, H)

    kernel = functools.partial(
        _multiple_loss_kernel, alpha=float(alpha), n_heads=n_heads,
        batch=B, tile_b=tile_b)

    # Targets ride as a (tile_b, H) block: tiny (H*4 B/row) next to the logits,
    # and keeping them row-major avoids an in-kernel transpose of an
    # H(=5)-sublane int block.
    in_specs = [pl.BlockSpec((tile_b, n_heads), lambda t: (t, 0))]
    in_specs += [pl.BlockSpec((tile_b, c), lambda t: (t, 0)) for c in class_counts]

    itemsize = outputs[0].dtype.itemsize
    logit_bytes = sum(B * c * itemsize for c in class_counts)
    elems = sum(B * c for c in class_counts)

    out = pl.pallas_call(
        kernel,
        out_shape=jax.ShapeDtypeStruct((num_tiles, 8, 128), jnp.float32),
        grid_spec=pltpu.PrefetchScalarGridSpec(
            num_scalar_prefetch=0,
            grid=(num_tiles,),
            in_specs=in_specs,
            out_specs=pl.BlockSpec((1, 8, 128), lambda t: (t, 0, 0)),
        ),
        compiler_params=pltpu.CompilerParams(
            dimension_semantics=("parallel",),        # 2-TC sharding on v7x
            vmem_limit_bytes=32 << 20,                # above v5e's 16 MiB default,
        ),                                            # well under v7x's 64 MiB physical
        cost_estimate=pl.CostEstimate(
            flops=8 * elems,
            transcendentals=2 * elems,                # softmax exp + exp(s)
            bytes_accessed=logit_bytes + B * n_heads * 4 + num_tiles * 8 * 128 * 4),
    )(tgt, *outputs)

    # Reduce the per-tile partial losses (lane 0 of each tile carries the value).
    return jnp.sum(out[:, 0, 0])


def multiple_loss_reference(outputs, targets, alpha=1.0):
    """Pure-JAX reference matching the PyTorch forward."""
    def ce_on_softmax(logits, tgt):
        s = jax.nn.softmax(logits.astype(jnp.float32), axis=1)
        logp = jax.nn.log_softmax(s, axis=1)
        return -jnp.mean(logp[jnp.arange(logits.shape[0]), tgt])

    n = len(outputs)
    loss = ce_on_softmax(outputs[0], targets[:, 0])
    for i in range(1, n):
        loss = loss + (alpha / n) * ce_on_softmax(outputs[i], targets[:, i])
    return loss


if __name__ == "__main__":
    B, C, H = 8, 16, 5          # batch, classes per head, heads (1 main + 4 attribute)
    alpha = 1.0

    key = jax.random.PRNGKey(0)
    k_logits, k_tgt = jax.random.split(key)
    head_keys = jax.random.split(k_logits, H)
    outputs = [jax.random.normal(head_keys[i], (B, C), dtype=jnp.float32)
               for i in range(H)]
    targets = jax.random.randint(k_tgt, (B, H), 0, C, dtype=jnp.int32)

    loss = jax.block_until_ready(multiple_loss(outputs, targets, alpha=alpha))
    ref = jax.block_until_ready(multiple_loss_reference(outputs, targets, alpha=alpha))
    assert jnp.allclose(loss, ref, atol=1e-5, rtol=1e-5), (loss, ref)

    print("KERNEL_OK")
</pallas_src>

<mosaic_0001>
module attributes {stable_mosaic.version = 11 : i64} {
  func.func @_multiple_loss_kernel(%arg0: i32, %arg1: memref<8x5xi32, #tpu.memory_space<vmem>>, %arg2: memref<8x16xf32, #tpu.memory_space<vmem>>, %arg3: memref<8x16xf32, #tpu.memory_space<vmem>>, %arg4: memref<8x16xf32, #tpu.memory_space<vmem>>, %arg5: memref<8x16xf32, #tpu.memory_space<vmem>>, %arg6: memref<8x16xf32, #tpu.memory_space<vmem>>, %arg7: memref<1x8x128xf32, #tpu.memory_space<vmem>>) attributes {dimension_semantics = [#tpu.dimension_semantics<parallel>], iteration_bounds = array<i64: 1>, scalar_prefetch = 0 : i64, scratch_operands = 0 : i64, tpu.core_type = #tpu.core_type<tc>, window_params = [{transform_indices = @transform_0, window_bounds = array<i64: 8, 5>}, {transform_indices = @transform_1, window_bounds = array<i64: 8, 16>}, {transform_indices = @transform_2, window_bounds = array<i64: 8, 16>}, {transform_indices = @transform_3, window_bounds = array<i64: 8, 16>}, {transform_indices = @transform_4, window_bounds = array<i64: 8, 16>}, {transform_indices = @transform_5, window_bounds = array<i64: 8, 16>}, {transform_indices = @transform_6, window_bounds = array<i64: 1, 8, 128>}]} {
    %c0 = arith.constant 0 : index
    %c0_0 = arith.constant 0 : index
    %0 = vector.load %arg2[%c0, %c0_0] : memref<8x16xf32, #tpu.memory_space<vmem>>, vector<8x16xf32>
    %cst = arith.constant dense<0xFF800000> : vector<8xf32>
    %1 = vector.multi_reduction <maximumf>, %0, %cst [1] : vector<8x16xf32> to vector<8xf32>
    %2 = vector.shape_cast %1 : vector<8xf32> to vector<8x1xf32>
    %3 = vector.broadcast %2 : vector<8x1xf32> to vector<8x16xf32>
    %4 = arith.subf %0, %3 : vector<8x16xf32>
    %5 = math.exp %4 : vector<8x16xf32>
    %cst_1 = arith.constant dense<0.000000e+00> : vector<8xf32>
    %6 = vector.multi_reduction <add>, %5, %cst_1 [1] : vector<8x16xf32> to vector<8xf32>
    %7 = vector.shape_cast %6 : vector<8xf32> to vector<8x1xf32>
    %8 = tpu.reciprocal %7 {approx = true} : vector<8x1xf32> -> vector<8x1xf32>
    %9 = arith.mulf %7, %8 : vector<8x1xf32>
    %cst_2 = arith.constant 2.000000e+00 : f32
    %10 = vector.broadcast %cst_2 : f32 to vector<8x1xf32>
    %11 = arith.subf %10, %9 : vector<8x1xf32>
    %12 = arith.mulf %8, %11 : vector<8x1xf32>
    %13 = vector.broadcast %12 : vector<8x1xf32> to vector<8x16xf32>
    %14 = arith.mulf %5, %13 : vector<8x16xf32>
    %15 = math.exp %14 : vector<8x16xf32>
    %cst_3 = arith.constant dense<0.000000e+00> : vector<8xf32>
    %16 = vector.multi_reduction <add>, %15, %cst_3 [1] : vector<8x16xf32> to vector<8xf32>
    %17 = vector.shape_cast %16 : vector<8xf32> to vector<8x1xf32>
    %18 = math.log %17 : vector<8x1xf32>
    %19 = tpu.iota {dimensions = array<i32: 1>} : vector<8x16xi32>
    %c0_4 = arith.constant 0 : index
    %c0_5 = arith.constant 0 : index
    %20 = vector.load %arg1[%c0_4, %c0_5] : memref<8x5xi32, #tpu.memory_space<vmem>>, vector<8x1xi32>
    %21 = vector.broadcast %20 : vector<8x1xi32> to vector<8x16xi32>
    %22 = arith.cmpi eq, %19, %21 : vector<8x16xi32>
    %cst_6 = arith.constant 0.000000e+00 : f32
    %23 = vector.broadcast %cst_6 : f32 to vector<8x16xf32>
    %24 = arith.select %22, %14, %23 : vector<8x16xi1>, vector<8x16xf32>
    %cst_7 = arith.constant dense<0.000000e+00> : vector<8xf32>
    %25 = vector.multi_reduction <add>, %24, %cst_7 [1] : vector<8x16xf32> to vector<8xf32>
    %26 = vector.shape_cast %25 : vector<8xf32> to vector<8x1xf32>
    %27 = arith.subf %18, %26 : vector<8x1xf32>
    %28 = vector.shape_cast %27 : vector<8x1xf32> to vector<1x8x1xf32>
    %cst_8 = arith.constant dense<0.000000e+00> : vector<1xf32>
    %29 = vector.multi_reduction <add>, %28, %cst_8 [1, 2] : vector<1x8x1xf32> to vector<1xf32>
    %30 = vector.shape_cast %29 : vector<1xf32> to vector<1x1x1xf32>
    %31 = vector.extract %30[0, 0, 0] : f32 from vector<1x1x1xf32>
    %cst_9 = arith.constant 1.250000e-01 : f32
    %32 = arith.mulf %cst_9, %31 : f32
    %cst_10 = arith.constant 0.000000e+00 : f32
    %33 = arith.addf %cst_10, %32 : f32
    %c0_11 = arith.constant 0 : index
    %c0_12 = arith.constant 0 : index
    %34 = vector.load %arg3[%c0_11, %c0_12] : memref<8x16xf32, #tpu.memory_space<vmem>>, vector<8x16xf32>
    %cst_13 = arith.constant dense<0xFF800000> : vector<8xf32>
    %35 = vector.multi_reduction <maximumf>, %34, %cst_13 [1] : vector<8x16xf32> to vector<8xf32>
    %36 = vector.shape_cast %35 : vector<8xf32> to vector<8x1xf32>
    %37 = vector.broadcast %36 : vector<8x1xf32> to vector<8x16xf32>
    %38 = arith.subf %34, %37 : vector<8x16xf32>
    %39 = math.exp %38 : vector<8x16xf32>
    %cst_14 = arith.constant dense<0.000000e+00> : vector<8xf32>
    %40 = vector.multi_reduction <add>, %39, %cst_14 [1] : vector<8x16xf32> to vector<8xf32>
    %41 = vector.shape_cast %40 : vector<8xf32> to vector<8x1xf32>
    %42 = tpu.reciprocal %41 {approx = true} : vector<8x1xf32> -> vector<8x1xf32>
    %43 = arith.mulf %41, %42 : vector<8x1xf32>
    %cst_15 = arith.constant 2.000000e+00 : f32
    %44 = vector.broadcast %cst_15 : f32 to vector<8x1xf32>
    %45 = arith.subf %44, %43 : vector<8x1xf32>
    %46 = arith.mulf %42, %45 : vector<8x1xf32>
    %47 = vector.broadcast %46 : vector<8x1xf32> to vector<8x16xf32>
    %48 = arith.mulf %39, %47 : vector<8x16xf32>
    %49 = math.exp %48 : vector<8x16xf32>
    %cst_16 = arith.constant dense<0.000000e+00> : vector<8xf32>
    %50 = vector.multi_reduction <add>, %49, %cst_16 [1] : vector<8x16xf32> to vector<8xf32>
    %51 = vector.shape_cast %50 : vector<8xf32> to vector<8x1xf32>
    %52 = math.log %51 : vector<8x1xf32>
    %53 = tpu.iota {dimensions = array<i32: 1>} : vector<8x16xi32>
    %c0_17 = arith.constant 0 : index
    %c1 = arith.constant 1 : index
    %54 = vector.load %arg1[%c0_17, %c1] : memref<8x5xi32, #tpu.memory_space<vmem>>, vector<8x1xi32>
    %55 = vector.broadcast %54 : vector<8x1xi32> to vector<8x16xi32>
    %56 = arith.cmpi eq, %53, %55 : vector<8x16xi32>
    %cst_18 = arith.constant 0.000000e+00 : f32
    %57 = vector.broadcast %cst_18 : f32 to vector<8x16xf32>
    %58 = arith.select %56, %48, %57 : vector<8x16xi1>, vector<8x16xf32>
    %cst_19 = arith.constant dense<0.000000e+00> : vector<8xf32>
    %59 = vector.multi_reduction <add>, %58, %cst_19 [1] : vector<8x16xf32> to vector<8xf32>
    %60 = vector.shape_cast %59 : vector<8xf32> to vector<8x1xf32>
    %61 = arith.subf %52, %60 : vector<8x1xf32>
    %62 = vector.shape_cast %61 : vector<8x1xf32> to vector<1x8x1xf32>
    %cst_20 = arith.constant dense<0.000000e+00> : vector<1xf32>
    %63 = vector.multi_reduction <add>, %62, %cst_20 [1, 2] : vector<1x8x1xf32> to vector<1xf32>
    %64 = vector.shape_cast %63 : vector<1xf32> to vector<1x1x1xf32>
    %65 = vector.extract %64[0, 0, 0] : f32 from vector<1x1x1xf32>
    %cst_21 = arith.constant 2.500000e-02 : f32
    %66 = arith.mulf %cst_21, %65 : f32
    %67 = arith.addf %33, %66 : f32
    %c0_22 = arith.constant 0 : index
    %c0_23 = arith.constant 0 : index
    %68 = vector.load %arg4[%c0_22, %c0_23] : memref<8x16xf32, #tpu.memory_space<vmem>>, vector<8x16xf32>
    %cst_24 = arith.constant dense<0xFF800000> : vector<8xf32>
    %69 = vector.multi_reduction <maximumf>, %68, %cst_24 [1] : vector<8x16xf32> to vector<8xf32>
    %70 = vector.shape_cast %69 : vector<8xf32> to vector<8x1xf32>
    %71 = vector.broadcast %70 : vector<8x1xf32> to vector<8x16xf32>
    %72 = arith.subf %68, %71 : vector<8x16xf32>
    %73 = math.exp %72 : vector<8x16xf32>
    %cst_25 = arith.constant dense<0.000000e+00> : vector<8xf32>
    %74 = vector.multi_reduction <add>, %73, %cst_25 [1] : vector<8x16xf32> to vector<8xf32>
    %75 = vector.shape_cast %74 : vector<8xf32> to vector<8x1xf32>
    %76 = tpu.reciprocal %75 {approx = true} : vector<8x1xf32> -> vector<8x1xf32>
    %77 = arith.mulf %75, %76 : vector<8x1xf32>
    %cst_26 = arith.constant 2.000000e+00 : f32
    %78 = vector.broadcast %cst_26 : f32 to vector<8x1xf32>
    %79 = arith.subf %78, %77 : vector<8x1xf32>
    %80 = arith.mulf %76, %79 : vector<8x1xf32>
    %81 = vector.broadcast %80 : vector<8x1xf32> to vector<8x16xf32>
    %82 = arith.mulf %73, %81 : vector<8x16xf32>
    %83 = math.exp %82 : vector<8x16xf32>
    %cst_27 = arith.constant dense<0.000000e+00> : vector<8xf32>
    %84 = vector.multi_reduction <add>, %83, %cst_27 [1] : vector<8x16xf32> to vector<8xf32>
    %85 = vector.shape_cast %84 : vector<8xf32> to vector<8x1xf32>
    %86 = math.log %85 : vector<8x1xf32>
    %87 = tpu.iota {dimensions = array<i32: 1>} : vector<8x16xi32>
    %c0_28 = arith.constant 0 : index
    %c2 = arith.constant 2 : index
    %88 = vector.load %arg1[%c0_28, %c2] : memref<8x5xi32, #tpu.memory_space<vmem>>, vector<8x1xi32>
    %89 = vector.broadcast %88 : vector<8x1xi32> to vector<8x16xi32>
    %90 = arith.cmpi eq, %87, %89 : vector<8x16xi32>
    %cst_29 = arith.constant 0.000000e+00 : f32
    %91 = vector.broadcast %cst_29 : f32 to vector<8x16xf32>
    %92 = arith.select %90, %82, %91 : vector<8x16xi1>, vector<8x16xf32>
    %cst_30 = arith.constant dense<0.000000e+00> : vector<8xf32>
    %93 = vector.multi_reduction <add>, %92, %cst_30 [1] : vector<8x16xf32> to vector<8xf32>
    %94 = vector.shape_cast %93 : vector<8xf32> to vector<8x1xf32>
    %95 = arith.subf %86, %94 : vector<8x1xf32>
    %96 = vector.shape_cast %95 : vector<8x1xf32> to vector<1x8x1xf32>
    %cst_31 = arith.constant dense<0.000000e+00> : vector<1xf32>
    %97 = vector.multi_reduction <add>, %96, %cst_31 [1, 2] : vector<1x8x1xf32> to vector<1xf32>
    %98 = vector.shape_cast %97 : vector<1xf32> to vector<1x1x1xf32>
    %99 = vector.extract %98[0, 0, 0] : f32 from vector<1x1x1xf32>
    %cst_32 = arith.constant 2.500000e-02 : f32
    %100 = arith.mulf %cst_32, %99 : f32
    %101 = arith.addf %67, %100 : f32
    %c0_33 = arith.constant 0 : index
    %c0_34 = arith.constant 0 : index
    %102 = vector.load %arg5[%c0_33, %c0_34] : memref<8x16xf32, #tpu.memory_space<vmem>>, vector<8x16xf32>
    %cst_35 = arith.constant dense<0xFF800000> : vector<8xf32>
    %103 = vector.multi_reduction <maximumf>, %102, %cst_35 [1] : vector<8x16xf32> to vector<8xf32>
    %104 = vector.shape_cast %103 : vector<8xf32> to vector<8x1xf32>
    %105 = vector.broadcast %104 : vector<8x1xf32> to vector<8x16xf32>
    %106 = arith.subf %102, %105 : vector<8x16xf32>
    %107 = math.exp %106 : vector<8x16xf32>
    %cst_36 = arith.constant dense<0.000000e+00> : vector<8xf32>
    %108 = vector.multi_reduction <add>, %107, %cst_36 [1] : vector<8x16xf32> to vector<8xf32>
    %109 = vector.shape_cast %108 : vector<8xf32> to vector<8x1xf32>
    %110 = tpu.reciprocal %109 {approx = true} : vector<8x1xf32> -> vector<8x1xf32>
    %111 = arith.mulf %109, %110 : vector<8x1xf32>
    %cst_37 = arith.constant 2.000000e+00 : f32
    %112 = vector.broadcast %cst_37 : f32 to vector<8x1xf32>
    %113 = arith.subf %112, %111 : vector<8x1xf32>
    %114 = arith.mulf %110, %113 : vector<8x1xf32>
    %115 = vector.broadcast %114 : vector<8x1xf32> to vector<8x16xf32>
    %116 = arith.mulf %107, %115 : vector<8x16xf32>
    %117 = math.exp %116 : vector<8x16xf32>
    %cst_38 = arith.constant dense<0.000000e+00> : vector<8xf32>
    %118 = vector.multi_reduction <add>, %117, %cst_38 [1] : vector<8x16xf32> to vector<8xf32>
    %119 = vector.shape_cast %118 : vector<8xf32> to vector<8x1xf32>
    %120 = math.log %119 : vector<8x1xf32>
    %121 = tpu.iota {dimensions = array<i32: 1>} : vector<8x16xi32>
    %c0_39 = arith.constant 0 : index
    %c3 = arith.constant 3 : index
    %122 = vector.load %arg1[%c0_39, %c3] : memref<8x5xi32, #tpu.memory_space<vmem>>, vector<8x1xi32>
    %123 = vector.broadcast %122 : vector<8x1xi32> to vector<8x16xi32>
    %124 = arith.cmpi eq, %121, %123 : vector<8x16xi32>
    %cst_40 = arith.constant 0.000000e+00 : f32
    %125 = vector.broadcast %cst_40 : f32 to vector<8x16xf32>
    %126 = arith.select %124, %116, %125 : vector<8x16xi1>, vector<8x16xf32>
    %cst_41 = arith.constant dense<0.000000e+00> : vector<8xf32>
    %127 = vector.multi_reduction <add>, %126, %cst_41 [1] : vector<8x16xf32> to vector<8xf32>
    %128 = vector.shape_cast %127 : vector<8xf32> to vector<8x1xf32>
    %129 = arith.subf %120, %128 : vector<8x1xf32>
    %130 = vector.shape_cast %129 : vector<8x1xf32> to vector<1x8x1xf32>
    %cst_42 = arith.constant dense<0.000000e+00> : vector<1xf32>
    %131 = vector.multi_reduction <add>, %130, %cst_42 [1, 2] : vector<1x8x1xf32> to vector<1xf32>
    %132 = vector.shape_cast %131 : vector<1xf32> to vector<1x1x1xf32>
    %133 = vector.extract %132[0, 0, 0] : f32 from vector<1x1x1xf32>
    %cst_43 = arith.constant 2.500000e-02 : f32
    %134 = arith.mulf %cst_43, %133 : f32
    %135 = arith.addf %101, %134 : f32
    %c0_44 = arith.constant 0 : index
    %c0_45 = arith.constant 0 : index
    %136 = vector.load %arg6[%c0_44, %c0_45] : memref<8x16xf32, #tpu.memory_space<vmem>>, vector<8x16xf32>
    %cst_46 = arith.constant dense<0xFF800000> : vector<8xf32>
    %137 = vector.multi_reduction <maximumf>, %136, %cst_46 [1] : vector<8x16xf32> to vector<8xf32>
    %138 = vector.shape_cast %137 : vector<8xf32> to vector<8x1xf32>
    %139 = vector.broadcast %138 : vector<8x1xf32> to vector<8x16xf32>
    %140 = arith.subf %136, %139 : vector<8x16xf32>
    %141 = math.exp %140 : vector<8x16xf32>
    %cst_47 = arith.constant dense<0.000000e+00> : vector<8xf32>
    %142 = vector.multi_reduction <add>, %141, %cst_47 [1] : vector<8x16xf32> to vector<8xf32>
    %143 = vector.shape_cast %142 : vector<8xf32> to vector<8x1xf32>
    %144 = tpu.reciprocal %143 {approx = true} : vector<8x1xf32> -> vector<8x1xf32>
    %145 = arith.mulf %143, %144 : vector<8x1xf32>
    %cst_48 = arith.constant 2.000000e+00 : f32
    %146 = vector.broadcast %cst_48 : f32 to vector<8x1xf32>
    %147 = arith.subf %146, %145 : vector<8x1xf32>
    %148 = arith.mulf %144, %147 : vector<8x1xf32>
    %149 = vector.broadcast %148 : vector<8x1xf32> to vector<8x16xf32>
    %150 = arith.mulf %141, %149 : vector<8x16xf32>
    %151 = math.exp %150 : vector<8x16xf32>
    %cst_49 = arith.constant dense<0.000000e+00> : vector<8xf32>
    %152 = vector.multi_reduction <add>, %151, %cst_49 [1] : vector<8x16xf32> to vector<8xf32>
    %153 = vector.shape_cast %152 : vector<8xf32> to vector<8x1xf32>
    %154 = math.log %153 : vector<8x1xf32>
    %155 = tpu.iota {dimensions = array<i32: 1>} : vector<8x16xi32>
    %c0_50 = arith.constant 0 : index
    %c4 = arith.constant 4 : index
    %156 = vector.load %arg1[%c0_50, %c4] : memref<8x5xi32, #tpu.memory_space<vmem>>, vector<8x1xi32>
    %157 = vector.broadcast %156 : vector<8x1xi32> to vector<8x16xi32>
    %158 = arith.cmpi eq, %155, %157 : vector<8x16xi32>
    %cst_51 = arith.constant 0.000000e+00 : f32
    %159 = vector.broadcast %cst_51 : f32 to vector<8x16xf32>
    %160 = arith.select %158, %150, %159 : vector<8x16xi1>, vector<8x16xf32>
    %cst_52 = arith.constant dense<0.000000e+00> : vector<8xf32>
    %161 = vector.multi_reduction <add>, %160, %cst_52 [1] : vector<8x16xf32> to vector<8xf32>
    %162 = vector.shape_cast %161 : vector<8xf32> to vector<8x1xf32>
    %163 = arith.subf %154, %162 : vector<8x1xf32>
    %164 = vector.shape_cast %163 : vector<8x1xf32> to vector<1x8x1xf32>
    %cst_53 = arith.constant dense<0.000000e+00> : vector<1xf32>
    %165 = vector.multi_reduction <add>, %164, %cst_53 [1, 2] : vector<1x8x1xf32> to vector<1xf32>
    %166 = vector.shape_cast %165 : vector<1xf32> to vector<1x1x1xf32>
    %167 = vector.extract %166[0, 0, 0] : f32 from vector<1x1x1xf32>
    %cst_54 = arith.constant 2.500000e-02 : f32
    %168 = arith.mulf %cst_54, %167 : f32
    %169 = arith.addf %135, %168 : f32
    %170 = vector.broadcast %169 : f32 to vector<1x8x128xf32>
    %c0_55 = arith.constant 0 : index
    %c0_56 = arith.constant 0 : index
    %c0_57 = arith.constant 0 : index
    %171 = vector.load %arg7[%c0_55, %c0_56, %c0_57] : memref<1x8x128xf32, #tpu.memory_space<vmem>>, vector<1x8x128xf32>
    tpu.vector_store %arg7[%c0_55, %c0_56, %c0_57], %170 {strides = array<i32>} : memref<1x8x128xf32, #tpu.memory_space<vmem>>, vector<1x8x128xf32>,
    return
  }
  func.func @transform_0(%arg0: i32) -> (i32, i32) {
    %c0_i32 = arith.constant 0 : i32
    %c0_i32_0 = arith.constant 0 : i32
    return %arg0, %c0_i32 : i32, i32
  }
  func.func @transform_1(%arg0: i32) -> (i32, i32) {
    %c0_i32 = arith.constant 0 : i32
    %c0_i32_0 = arith.constant 0 : i32
    return %arg0, %c0_i32 : i32, i32
  }
  func.func @transform_2(%arg0: i32) -> (i32, i32) {
    %c0_i32 = arith.constant 0 : i32
    %c0_i32_0 = arith.constant 0 : i32
    return %arg0, %c0_i32 : i32, i32
  }
  func.func @transform_3(%arg0: i32) -> (i32, i32) {
    %c0_i32 = arith.constant 0 : i32
    %c0_i32_0 = arith.constant 0 : i32
    return %arg0, %c0_i32 : i32, i32
  }
  func.func @transform_4(%arg0: i32) -> (i32, i32) {
    %c0_i32 = arith.constant 0 : i32
    %c0_i32_0 = arith.constant 0 : i32
    return %arg0, %c0_i32 : i32, i32
  }
  func.func @transform_5(%arg0: i32) -> (i32, i32) {
    %c0_i32 = arith.constant 0 : i32
    %c0_i32_0 = arith.constant 0 : i32
    return %arg0, %c0_i32 : i32, i32
  }
  func.func @transform_6(%arg0: i32) -> (i32, i32, i32) {
    %c0_i32 = arith.constant 0 : i32
    %c0_i32_0 = arith.constant 0 : i32
    %c0_i32_1 = arith.constant 0 : i32
    return %arg0, %c0_i32, %c0_i32_0 : i32, i32, i32
  }
}

</mosaic_0001>

<llo_original>
// kernel: tpu_custom_call.1
$region0: #{tpu_custom_call.1}
  #allocation0 [shape = 'u32[]', space=smem, size = 0x4, offset = 0x4, fixed_abs, tag = 'smem constant byte address 0x4 - core index']
  #allocation1 [shape = 'u32[72,128]{1,0:T(1,128)}', space=vmem, size = 0x9000, scoped, tag = 'internal scratch']
  %s0 = inlined_call_operand.hbm [shape: s32[8,5], index: 0, kind: input, shape index: {}]
  %s1 = inlined_call_operand.hbm [shape: f32[8,16], index: 1, kind: input, shape index: {}]
  %s2 = inlined_call_operand.hbm [shape: f32[8,16], index: 2, kind: input, shape index: {}]
  %s3 = inlined_call_operand.hbm [shape: f32[8,16], index: 3, kind: input, shape index: {}]
  %s4 = inlined_call_operand.hbm [shape: f32[8,16], index: 4, kind: input, shape index: {}]
  %s5 = inlined_call_operand.hbm [shape: f32[8,16], index: 5, kind: input, shape index: {}]
  %s6 = inlined_call_operand.hbm [shape: f32[1,8,128], index: 6, kind: output, shape index: {}]
  %s7 = sld [smem:[#allocation0]]
  $region58: #{tpu_custom_call.1} parent=0
    _
  %s9 = ssub.s32 1, %s7
  %s10 = scalar_select 0, %s9, %s7
  $region1: #{tpu_custom_call.1} parent=0
    #allocation2 [shape = 'u8[4096]{0}', space=vmem, size = 0x1000, scoped, tag = 'input window, operand 0, single buffered']
    #allocation3 [shape = 's32[1]{0}', space=sflag, size = 0x4, scoped, tag = 'scoped memory for tpu_custom_call.1']
    #allocation4 [shape = 's32[1]{0}', space=sflag, size = 0x4, scoped, tag = 'scoped memory for tpu_custom_call.1']
    #allocation5 [shape = 'u8[4096]{0}', space=vmem, size = 0x1000, scoped, tag = 'input window, operand 1, single buffered']
    #allocation6 [shape = 's32[1]{0}', space=sflag, size = 0x4, scoped, tag = 'scoped memory for tpu_custom_call.1']
    #allocation7 [shape = 'u8[4096]{0}', space=vmem, size = 0x1000, scoped, tag = 'input window, operand 2, single buffered']
    #allocation8 [shape = 'u8[4096]{0}', space=vmem, size = 0x1000, scoped, tag = 'input window, operand 3, single buffered']
    #allocation9 [shape = 's32[1]{0}', space=sflag, size = 0x4, scoped, tag = 'scoped memory for tpu_custom_call.1']
    #allocation10 [shape = 'u8[4096]{0}', space=vmem, size = 0x1000, scoped, tag = 'input window, operand 4, single buffered']
    #allocation11 [shape = 'u8[4096]{0}', space=vmem, size = 0x1000, scoped, tag = 'input window, operand 5, single buffered']
    #allocation12 [shape = 's32[1]{0}', space=sflag, size = 0x4, scoped, tag = 'scoped memory for tpu_custom_call.1']
    #allocation13 [shape = 'u8[4096]{0}', space=vmem, size = 0x1000, scoped, tag = 'output window, operand 0, single buffered']
    %11 = vsyncpa [#allocation3], 0
    %12 = vsyncpa [#allocation6], 0
    %13 = vsyncpa [#allocation9], 0
    %14 = vsyncpa [#allocation12], 0
    %15 = vsyncpa [#allocation4], 0
    // Predicated region
    $region2: #{tpu_custom_call.1} parent=1 // pred_check
      _
    $region3: #{tpu_custom_call.1} parent=1 // pred_check_branch
      %17 = sbr.rel (0) target = $region5
    $region4: #{tpu_custom_call.1} parent=1 // pred_region
      %19 = vsyncadd [#allocation3], 0
      %s21 = sshll.u32 %s0, 4
      %s22 = int_to_ptr.hbm [resolvable:$true] %s21
      %s23 = sshll.u32 [#allocation2], 4
      %s24 = int_to_ptr.vmem [resolvable:$true] %s23
      %26 = dma.hbm_to_vmem [thread:$0]  %s22, 128, %s24, [#allocation3]
    $region5: #{tpu_custom_call.1} parent=1 // pred_fallthru
      _
    // Predicated region
    $region6: #{tpu_custom_call.1} parent=1 // pred_check
      _
    $region7: #{tpu_custom_call.1} parent=1 // pred_check_branch
      %28 = sbr.rel (0) target = $region9
    $region8: #{tpu_custom_call.1} parent=1 // pred_region
      %30 = vsyncadd [#allocation6], 0
      %s32 = sshll.u32 %s1, 4
      %s33 = int_to_ptr.hbm [resolvable:$true] %s32
      %s34 = sshll.u32 [#allocation5], 4
      %s35 = int_to_ptr.vmem [resolvable:$true] %s34
      %37 = dma.hbm_to_vmem [thread:$0]  %s33, 128, %s35, [#allocation6]
    $region9: #{tpu_custom_call.1} parent=1 // pred_fallthru
      _
    // Predicated region
    $region10: #{tpu_custom_call.1} parent=1 // pred_check
      _
    $region11: #{tpu_custom_call.1} parent=1 // pred_check_branch
      %39 = sbr.rel (0) target = $region13
    $region12: #{tpu_custom_call.1} parent=1 // pred_region
      %41 = vsyncadd [#allocation6], 0
      %s43 = sshll.u32 %s2, 4
      %s44 = int_to_ptr.hbm [resolvable:$true] %s43
      %s45 = sshll.u32 [#allocation7], 4
      %s46 = int_to_ptr.vmem [resolvable:$true] %s45
      %48 = dma.hbm_to_vmem [thread:$0]  %s44, 128, %s46, [#allocation6]
    $region13: #{tpu_custom_call.1} parent=1 // pred_fallthru
      _
    // Predicated region
    $region14: #{tpu_custom_call.1} parent=1 // pred_check
      _
    $region15: #{tpu_custom_call.1} parent=1 // pred_check_branch
      %50 = sbr.rel (0) target = $region17
    $region16: #{tpu_custom_call.1} parent=1 // pred_region
      %52 = vsyncadd [#allocation9], 0
      %s54 = sshll.u32 %s3, 4
      %s55 = int_to_ptr.hbm [resolvable:$true] %s54
      %s56 = sshll.u32 [#allocation8], 4
      %s57 = int_to_ptr.vmem [resolvable:$true] %s56
      %59 = dma.hbm_to_vmem [thread:$0]  %s55, 128, %s57, [#allocation9]
    $region17: #{tpu_custom_call.1} parent=1 // pred_fallthru
      _
    // Predicated region
    $region18: #{tpu_custom_call.1} parent=1 // pred_check
      _
    $region19: #{tpu_custom_call.1} parent=1 // pred_check_branch
      %61 = sbr.rel (0) target = $region21
    $region20: #{tpu_custom_call.1} parent=1 // pred_region
      %63 = vsyncadd [#allocation9], 0
      %s65 = sshll.u32 %s4, 4
      %s66 = int_to_ptr.hbm [resolvable:$true] %s65
      %s67 = sshll.u32 [#allocation10], 4
      %s68 = int_to_ptr.vmem [resolvable:$true] %s67
      %70 = dma.hbm_to_vmem [thread:$0]  %s66, 128, %s68, [#allocation9]
    $region21: #{tpu_custom_call.1} parent=1 // pred_fallthru
      _
    // Predicated region
    $region22: #{tpu_custom_call.1} parent=1 // pred_check
      _
    $region23: #{tpu_custom_call.1} parent=1 // pred_check_branch
      %72 = sbr.rel (0) target = $region25
    $region24: #{tpu_custom_call.1} parent=1 // pred_region
      %74 = vsyncadd [#allocation12], 0
      %s76 = sshll.u32 %s5, 4
      %s77 = int_to_ptr.hbm [resolvable:$true] %s76
      %s78 = sshll.u32 [#allocation11], 4
      %s79 = int_to_ptr.vmem [resolvable:$true] %s78
      %81 = dma.hbm_to_vmem [thread:$0]  %s77, 128, %s79, [#allocation12]
    $region25: #{tpu_custom_call.1} parent=1 // pred_fallthru
      _
    // Predicated region
    $region26: #{tpu_custom_call.1} parent=1 // pred_check
      _
    $region27: #{tpu_custom_call.1} parent=1 // pred_check_branch
      %83 = sbr.rel (0) target = $region29
    $region28: #{tpu_custom_call.1} parent=1 // pred_region
      %85 = dma.done [#allocation3], 128
    $region29: #{tpu_custom_call.1} parent=1 // pred_fallthru
      _
    // Predicated region
    $region30: #{tpu_custom_call.1} parent=1 // pred_check
      _
    $region31: #{tpu_custom_call.1} parent=1 // pred_check_branch
      %87 = sbr.rel (0) target = $region33
    $region32: #{tpu_custom_call.1} parent=1 // pred_region
      %89 = dma.done [#allocation6], 128
    $region33: #{tpu_custom_call.1} parent=1 // pred_fallthru
      _
    // Predicated region
    $region34: #{tpu_custom_call.1} parent=1 // pred_check
      _
    $region35: #{tpu_custom_call.1} parent=1 // pred_check_branch
      %91 = sbr.rel (0) target = $region37
    $region36: #{tpu_custom_call.1} parent=1 // pred_region
      %93 = dma.done [#allocation6], 128
    $region37: #{tpu_custom_call.1} parent=1 // pred_fallthru
      _
    // Predicated region
    $region38: #{tpu_custom_call.1} parent=1 // pred_check
      _
    $region39: #{tpu_custom_call.1} parent=1 // pred_check_branch
      %95 = sbr.rel (0) target = $region41
    $region40: #{tpu_custom_call.1} parent=1 // pred_region
      %97 = dma.done [#allocation9], 128
    $region41: #{tpu_custom_call.1} parent=1 // pred_fallthru
      _
    // Predicated region
    $region42: #{tpu_custom_call.1} parent=1 // pred_check
      _
    $region43: #{tpu_custom_call.1} parent=1 // pred_check_branch
      %99 = sbr.rel (0) target = $region45
    $region44: #{tpu_custom_call.1} parent=1 // pred_region
      %101 = dma.done [#allocation9], 128
    $region45: #{tpu_custom_call.1} parent=1 // pred_fallthru
      _
    // Predicated region
    $region46: #{tpu_custom_call.1} parent=1 // pred_check
      _
    $region47: #{tpu_custom_call.1} parent=1 // pred_check_branch
      %103 = sbr.rel (0) target = $region49
    $region48: #{tpu_custom_call.1} parent=1 // pred_region
      %105 = dma.done [#allocation12], 128
    $region49: #{tpu_custom_call.1} parent=1 // pred_fallthru
      _
    %v106 = vld [vmem:[#allocation5] sm:$0xff]
    %vm107 = vcmask 130048
    %v108 = vsel %vm107, %v106, -inf
    %109 = vmax.xlane.f32.xlu0 %v108
    %v110 = vpop.xlane.xlu0 %109
    %v111 = vsub.f32 %v106, %v110
    %v112 = vmul.f32 %v111, 1.442695
    %v113 = vpow.pop %v112
    %v114 = vsel %vm107, %v113, 0.0
    %115 = vadd.xlane.f32.xlu0 %v114
    %v116 = vpop.xlane.xlu0 %115
    %v117 = vrcp.pop %v116
    %v118 = vmul.f32 %v116, %v117
    %v119 = vsub.f32 2.0, %v118
    %v120 = vmul.f32 %v117, %v119
    %v121 = vmul.f32 %v113, %v120
    %v122 = vmul.f32 %v121, 1.442695
    %v123 = vpow.pop %v122
    %v124 = vsel %vm107, %v123, 0.0
    %125 = vadd.xlane.f32.xlu0 %v124
    %v126 = vpop.xlane.xlu0 %125
    %v127 = vlog2.pop %v126
    %v128 = vmul.f32 %v127, 0.6931472
    %v129 = vlaneseq
    %v130 = vand.u32 %v129, 127
    %v131 = vld [vmem:[#allocation2] sm:$0xff]
    %132 = vset.pattern.permute.xlu0 0
    %133 = vperm.xlu0 %132, %v131
    %v134 = vpop.permute.xlu0 %133
    %vm135 = vcmp.eq.s32.totalorder %v130, %v134
    %v136 = vsel %vm135, %v121, 0.0
    %v137 = vsel %vm107, %v136, 0.0
    %138 = vadd.xlane.f32.xlu0 %v137
    %v139 = vpop.xlane.xlu0 %138
    %v140 = vsub.f32 %v128, %v139
    %vm141 = vcmask 7168
    %v142 = vsel %vm141, %v140, 0.0
    %143 = vadd.xlane.f32.xlu0 %v142
    %v144 = vpop.xlane.xlu0 %143
    %v145 = vrot.slane %v144, 4
    %v146 = vadd.f32 %v144, %v145
    %v147 = vrot.slane %v146, 2
    %v148 = vadd.f32 %v146, %v147
    %v149 = vrot.slane %v148, 1
    %v150 = vadd.f32 %v148, %v149
    %s151 = vtos %v150
    %s152 = smul.f32 %s151, 0.125
    %s153 = sadd.f32 %s152, 0.0
    %v154 = vld [vmem:[#allocation7] sm:$0xff]
    %v155 = vsel %vm107, %v154, -inf
    %156 = vmax.xlane.f32.xlu0 %v155
    %v157 = vpop.xlane.xlu0 %156
    %v158 = vsub.f32 %v154, %v157
    %v159 = vmul.f32 %v158, 1.442695
    %v160 = vpow.pop %v159
    %v161 = vsel %vm107, %v160, 0.0
    %162 = vadd.xlane.f32.xlu0 %v161
    %v163 = vpop.xlane.xlu0 %162
    %v164 = vrcp.pop %v163
    %v165 = vmul.f32 %v163, %v164
    %v166 = vsub.f32 2.0, %v165
    %v167 = vmul.f32 %v164, %v166
    %v168 = vmul.f32 %v160, %v167
    %v169 = vmul.f32 %v168, 1.442695
    %v170 = vpow.pop %v169
    %v171 = vsel %vm107, %v170, 0.0
    %172 = vadd.xlane.f32.xlu0 %v171
    %v173 = vpop.xlane.xlu0 %172
    %v174 = vlog2.pop %v173
    %v175 = vmul.f32 %v174, 0.6931472
    %176 = vset.pattern.permute.xlu0 1
    %177 = vperm.xlu0 %176, %v131
    %v178 = vpop.permute.xlu0 %177
    %vm179 = vcmp.eq.s32.totalorder %v130, %v178
    %v180 = vsel %vm179, %v168, 0.0
    %v181 = vsel %vm107, %v180, 0.0
    %182 = vadd.xlane.f32.xlu0 %v181
    %v183 = vpop.xlane.xlu0 %182
    %v184 = vsub.f32 %v175, %v183
    %v185 = vsel %vm141, %v184, 0.0
    %186 = vadd.xlane.f32.xlu0 %v185
    %v187 = vpop.xlane.xlu0 %186
    %v188 = vrot.slane %v187, 4
    %v189 = vadd.f32 %v187, %v188
    %v190 = vrot.slane %v189, 2
    %v191 = vadd.f32 %v189, %v190
    %v192 = vrot.slane %v191, 1
    %v193 = vadd.f32 %v191, %v192
    %s194 = vtos %v193
    %s195 = smul.f32 %s194, 0.025
    %s196 = sadd.f32 %s153, %s195
    %v197 = vld [vmem:[#allocation8] sm:$0xff]
    %v198 = vsel %vm107, %v197, -inf
    %199 = vmax.xlane.f32.xlu0 %v198
    %v200 = vpop.xlane.xlu0 %199
    %v201 = vsub.f32 %v197, %v200
    %v202 = vmul.f32 %v201, 1.442695
    %v203 = vpow.pop %v202
    %v204 = vsel %vm107, %v203, 0.0
    %205 = vadd.xlane.f32.xlu0 %v204
    %v206 = vpop.xlane.xlu0 %205
    %v207 = vrcp.pop %v206
    %v208 = vmul.f32 %v206, %v207
    %v209 = vsub.f32 2.0, %v208
    %v210 = vmul.f32 %v207, %v209
    %v211 = vmul.f32 %v203, %v210
    %v212 = vmul.f32 %v211, 1.442695
    %v213 = vpow.pop %v212
    %v214 = vsel %vm107, %v213, 0.0
    %215 = vadd.xlane.f32.xlu0 %v214
    %v216 = vpop.xlane.xlu0 %215
    %v217 = vlog2.pop %v216
    %v218 = vmul.f32 %v217, 0.6931472
    %219 = vset.pattern.permute.xlu0 2
    %220 = vperm.xlu0 %219, %v131
    %v221 = vpop.permute.xlu0 %220
    %vm222 = vcmp.eq.s32.totalorder %v130, %v221
    %v223 = vsel %vm222, %v211, 0.0
    %v224 = vsel %vm107, %v223, 0.0
    %225 = vadd.xlane.f32.xlu0 %v224
    %v226 = vpop.xlane.xlu0 %225
    %v227 = vsub.f32 %v218, %v226
    %v228 = vsel %vm141, %v227, 0.0
    %229 = vadd.xlane.f32.xlu0 %v228
    %v230 = vpop.xlane.xlu0 %229
    %v231 = vrot.slane %v230, 4
    %v232 = vadd.f32 %v230, %v231
    %v233 = vrot.slane %v232, 2
    %v234 = vadd.f32 %v232, %v233
    %v235 = vrot.slane %v234, 1
    %v236 = vadd.f32 %v234, %v235
    %s237 = vtos %v236
    %s238 = smul.f32 %s237, 0.025
    %s239 = sadd.f32 %s196, %s238
    %v240 = vld [vmem:[#allocation10] sm:$0xff]
    %v241 = vsel %vm107, %v240, -inf
    %242 = vmax.xlane.f32.xlu0 %v241
    %v243 = vpop.xlane.xlu0 %242
    %v244 = vsub.f32 %v240, %v243
    %v245 = vmul.f32 %v244, 1.442695
    %v246 = vpow.pop %v245
    %v247 = vsel %vm107, %v246, 0.0
    %248 = vadd.xlane.f32.xlu0 %v247
    %v249 = vpop.xlane.xlu0 %248
    %v250 = vrcp.pop %v249
    %v251 = vmul.f32 %v249, %v250
    %v252 = vsub.f32 2.0, %v251
    %v253 = vmul.f32 %v250, %v252
    %v254 = vmul.f32 %v246, %v253
    %v255 = vmul.f32 %v254, 1.442695
    %v256 = vpow.pop %v255
    %v257 = vsel %vm107, %v256, 0.0
    %258 = vadd.xlane.f32.xlu0 %v257
    %v259 = vpop.xlane.xlu0 %258
    %v260 = vlog2.pop %v259
    %v261 = vmul.f32 %v260, 0.6931472
    %262 = vset.pattern.permute.xlu0 3
    %263 = vperm.xlu0 %262, %v131
    %v264 = vpop.permute.xlu0 %263
    %vm265 = vcmp.eq.s32.totalorder %v130, %v264
    %v266 = vsel %vm265, %v254, 0.0
    %v267 = vsel %vm107, %v266, 0.0
    %268 = vadd.xlane.f32.xlu0 %v267
    %v269 = vpop.xlane.xlu0 %268
    %v270 = vsub.f32 %v261, %v269
    %v271 = vsel %vm141, %v270, 0.0
    %272 = vadd.xlane.f32.xlu0 %v271
    %v273 = vpop.xlane.xlu0 %272
    %v274 = vrot.slane %v273, 4
    %v275 = vadd.f32 %v273, %v274
    %v276 = vrot.slane %v275, 2
    %v277 = vadd.f32 %v275, %v276
    %v278 = vrot.slane %v277, 1
    %v279 = vadd.f32 %v277, %v278
    %s280 = vtos %v279
    %s281 = smul.f32 %s280, 0.025
    %s282 = sadd.f32 %s239, %s281
    %v283 = vld [vmem:[#allocation11] sm:$0xff]
    %v284 = vsel %vm107, %v283, -inf
    %285 = vmax.xlane.f32.xlu0 %v284
    %v286 = vpop.xlane.xlu0 %285
    %v287 = vsub.f32 %v283, %v286
    %v288 = vmul.f32 %v287, 1.442695
    %v289 = vpow.pop %v288
    %v290 = vsel %vm107, %v289, 0.0
    %291 = vadd.xlane.f32.xlu0 %v290
    %v292 = vpop.xlane.xlu0 %291
    %v293 = vrcp.pop %v292
    %v294 = vmul.f32 %v292, %v293
    %v295 = vsub.f32 2.0, %v294
    %v296 = vmul.f32 %v293, %v295
    %v297 = vmul.f32 %v289, %v296
    %v298 = vmul.f32 %v297, 1.442695
    %v299 = vpow.pop %v298
    %v300 = vsel %vm107, %v299, 0.0
    %301 = vadd.xlane.f32.xlu0 %v300
    %v302 = vpop.xlane.xlu0 %301
    %v303 = vlog2.pop %v302
    %v304 = vmul.f32 %v303, 0.6931472
    %305 = vset.pattern.permute.xlu0 4
    %306 = vperm.xlu0 %305, %v131
    %v307 = vpop.permute.xlu0 %306
    %vm308 = vcmp.eq.s32.totalorder %v130, %v307
    %v309 = vsel %vm308, %v297, 0.0
    %v310 = vsel %vm107, %v309, 0.0
    %311 = vadd.xlane.f32.xlu0 %v310
    %v312 = vpop.xlane.xlu0 %311
    %v313 = vsub.f32 %v304, %v312
    %v314 = vsel %vm141, %v313, 0.0
    %315 = vadd.xlane.f32.xlu0 %v314
    %v316 = vpop.xlane.xlu0 %315
    %v317 = vrot.slane %v316, 4
    %v318 = vadd.f32 %v316, %v317
    %v319 = vrot.slane %v318, 2
    %v320 = vadd.f32 %v318, %v319
    %v321 = vrot.slane %v320, 1
    %v322 = vadd.f32 %v320, %v321
    %s323 = vtos %v322
    %s324 = smul.f32 %s323, 0.025
    %s325 = sadd.f32 %s282, %s324
    %v326 = vstv %s325
    %327 = vst [vmem:[#allocation13] sm:$0xff] %v326
    // Predicated region
    $region50: #{tpu_custom_call.1} parent=1 // pred_check
      _
    $region51: #{tpu_custom_call.1} parent=1 // pred_check_branch
      %329 = sbr.rel (0) target = $region53
    $region52: #{tpu_custom_call.1} parent=1 // pred_region
      %331 = vsyncadd [#allocation4], 0
      %s333 = sshll.u32 [#allocation13], 4
      %s334 = int_to_ptr.vmem [resolvable:$true] %s333
      %s335 = sshll.u32 %s6, 4
      %s336 = int_to_ptr.hbm [resolvable:$true] %s335
      %338 = dma.vmem_to_hbm [thread:$0]  %s334, 128, %s336, [#allocation4]
    $region53: #{tpu_custom_call.1} parent=1 // pred_fallthru
      _
    // Predicated region
    $region54: #{tpu_custom_call.1} parent=1 // pred_check
      _
    $region55: #{tpu_custom_call.1} parent=1 // pred_check_branch
      %340 = sbr.rel (0) target = $region57
    $region56: #{tpu_custom_call.1} parent=1 // pred_region
      %342 = dma.done [#allocation4], 128
    $region57: #{tpu_custom_call.1} parent=1 // pred_fallthru
      _
    %343 = vsyncpa [#allocation3], 1
    %344 = vsyncpa [#allocation6], 1
    %345 = vsyncpa [#allocation9], 1
    %346 = vsyncpa [#allocation12], 1
    %347 = vsyncpa [#allocation4], 1

</llo_original>
